<compile_context>
chip_gen: v5e
topology: v5e:2x2
jax: 0.10.0
libtpu: 0.0.40
codegen_flags: <defaults>
</compile_context>

<pallas_src>
import jax
import jax.numpy as jnp
from jax.experimental import pallas as pl
from jax.experimental.pallas import tpu as pltpu

_SUBLANE = 8


def _round_up(x, m):
    return (x + m - 1) // m * m


def _default_vmem_limit():
    """Scoped-VMEM limit: ~75% of physical, capped (128 MiB parts -> 96 MiB,
    64 MiB v7x part -> 48 MiB)."""
    try:
        phys = pltpu.get_tpu_info().vmem_capacity_bytes
    except Exception:  # conservative fallback sized for the smallest (v7x) part
        phys = 64 * 1024 * 1024
    return int(min(phys * 3 // 4, 96 * 1024 * 1024))


def _pick_tm(n_rows, H, D, x_isz, res_isz, w_isz, out_isz, save_isz,
             budget, tm_max=512):
    """Largest row tile (multiple of 8, capped at tm_max) whose streamed
    double-buffered blocks + single-buffered resident weights + f32
    intermediates fit the VMEM budget."""
    # Weights / biases: constant index_map -> single-buffered (Buffered(1)).
    weight_bytes = 2 * H * D * w_isz + (H + D) * 4
    # Per-row streamed bytes: double-buffered input and output blocks, plus the
    # compiler-managed f32 matmul accumulators / epilogue temporaries.
    per_row = (2 * H * (x_isz + res_isz)                       # x, residual in
               + 2 * (H * out_isz + (H + D) * save_isz)        # out, up, down
               + (2 * H + D) * 4)                              # f32 intermediates
    avail = max(budget - weight_bytes, per_row * _SUBLANE)
    tm = max(_SUBLANE, min(tm_max, (avail // per_row) // _SUBLANE * _SUBLANE))
    tm = min(tm, _round_up(max(n_rows, 1), _SUBLANE))
    return int(tm)


def _adapter_kernel(x_ref, res_ref, wd_ref, bd_ref, wu_ref, bu_ref,
                    out_ref, down_ref, up_ref):
    """One row-tile of the adapter forward.

    x_ref:   (tm, H)  input hidden states (native / matmul dtype)
    res_ref: (tm, H)  residual_input (native dtype, cast to f32 here)
    wd_ref:  (H, D)   down-projection weight, transposed (in x out)
    bd_ref:  (1, D)   down-projection bias (f32)
    wu_ref:  (D, H)   up-projection weight, transposed, pre-scaled by `scaling`
    bu_ref:  (1, H)   up-projection bias, pre-scaled by `scaling`
    out_ref: (tm, H)  output = up + residual
    down_ref:(tm, D)  post-ReLU bottleneck activations
    up_ref:  (tm, H)  up-projected (already scaled) activations
    """
    x = x_ref[...]

    # adapter_down = Linear(H -> D) + ReLU (f32 accumulate, f32 epilogue).
    down = jnp.dot(x, wd_ref[...], preferred_element_type=jnp.float32)
    down = jnp.maximum(down + bd_ref[...].astype(jnp.float32), 0.0)

    # adapter_up = Linear(D -> H); scaling already folded into wu/bu.
    down_mm = down if wu_ref.dtype == jnp.float32 else down.astype(wu_ref.dtype)
    up = jnp.dot(down_mm, wu_ref[...], preferred_element_type=jnp.float32)
    up = up + bu_ref[...].astype(jnp.float32)

    # Residual add in f32; residual arrives in its native dtype (no wrapper cast).
    out = up + res_ref[...].astype(jnp.float32)

    down_ref[...] = down.astype(down_ref.dtype)
    up_ref[...] = up.astype(up_ref.dtype)
    out_ref[...] = out.astype(out_ref.dtype)


def prepare_adapter_params(w_down, b_down, w_up, b_up, *, scaling=1.0,
                           matmul_dtype=None):
    """One-time weight prep (hoist out of the per-call hot path).

    w_down: (D, H)  PyTorch nn.Linear layout (out x in);  b_down: (D,)
    w_up:   (H, D);                                        b_up:   (H,)
    matmul_dtype: e.g. jnp.bfloat16 for v5e/v6e/v7x MXU throughput + halved
                  weight DMA (f32 accumulation preserved in the kernel).
    Returns (wd_t, bd, wu_t, bu) ready for `adapter_forward`.
    """
    wd_t = jnp.asarray(w_down).astype(jnp.float32).T          # (H, D)
    wu_t = jnp.asarray(w_up).astype(jnp.float32).T            # (D, H)
    bd = jnp.asarray(b_down, jnp.float32).reshape(1, -1)      # (1, D)
    bu = jnp.asarray(b_up, jnp.float32).reshape(1, -1)        # (1, H)

    # Fold scalar `scaling` into the up-projection. Concretization-safe:
    # Python numbers are folded only when != 1.0; traced scalars always fold.
    if isinstance(scaling, (int, float)):
        if scaling != 1.0:
            wu_t = wu_t * scaling
            bu = bu * scaling
    else:
        wu_t = wu_t * scaling
        bu = bu * scaling

    if matmul_dtype is not None:
        wd_t = wd_t.astype(matmul_dtype)
        wu_t = wu_t.astype(matmul_dtype)
    return wd_t, bd, wu_t, bu


def adapter_forward(x, residual_input, params, *, out_dtype=None,
                    save_dtype=None, tm=None, vmem_limit_bytes=None):
    """Pallas reproduction of Adapter.forward (no gating, no layer norms).

    x, residual_input: (B, S, H) in their native dtype (pass bf16 activations
        directly for the fast path; no wrapper-side casts are performed).
    params: output of `prepare_adapter_params`.
    out_dtype:  dtype of `output` (default: x.dtype).
    save_dtype: dtype of the saved `down` / `up` activations (default: x.dtype).
                Use bf16 to halve the dominant writeback traffic.
    Returns (output, down, up) with shapes (B,S,H), (B,S,D), (B,S,H).
    """
    wd_t, bd, wu_t, bu = params
    B, S, H = x.shape
    D = wd_t.shape[1]
    N = B * S
    out_dtype = jnp.dtype(out_dtype) if out_dtype is not None else x.dtype
    save_dtype = jnp.dtype(save_dtype) if save_dtype is not None else x.dtype

    # Flatten tokens; no dtype casts, no padding passes in the wrapper.
    x2 = x.reshape(N, H)
    r2 = residual_input.reshape(N, H)

    if vmem_limit_bytes is None:
        vmem_limit_bytes = _default_vmem_limit()
    if tm is None:
        tm = _pick_tm(
            N, H, D,
            jnp.dtype(x2.dtype).itemsize, jnp.dtype(r2.dtype).itemsize,
            jnp.dtype(wd_t.dtype).itemsize,
            jnp.dtype(out_dtype).itemsize, jnp.dtype(save_dtype).itemsize,
            budget=int(vmem_limit_bytes * 0.8))

    # Row tail handled by grid overhang (masked writes) — no jnp.pad pass.
    grid = (pl.cdiv(N, tm),)
    single = pl.Buffered(buffer_count=1)   # weights/bias blocks never change

    out2, down2, up2 = pl.pallas_call(
        _adapter_kernel,
        out_shape=(
            jax.ShapeDtypeStruct((N, H), out_dtype),    # output
            jax.ShapeDtypeStruct((N, D), save_dtype),   # down
            jax.ShapeDtypeStruct((N, H), save_dtype),   # up
        ),
        grid_spec=pltpu.PrefetchScalarGridSpec(
            num_scalar_prefetch=0,
            grid=grid,
            in_specs=[
                pl.BlockSpec((tm, H), lambda i: (i, 0)),    # x tile
                pl.BlockSpec((tm, H), lambda i: (i, 0)),    # residual tile
                pl.BlockSpec((H, D), lambda i: (0, 0), pipeline_mode=single),
                pl.BlockSpec((1, D), lambda i: (0, 0), pipeline_mode=single),
                pl.BlockSpec((D, H), lambda i: (0, 0), pipeline_mode=single),
                pl.BlockSpec((1, H), lambda i: (0, 0), pipeline_mode=single),
            ],
            out_specs=[
                pl.BlockSpec((tm, H), lambda i: (i, 0)),
                pl.BlockSpec((tm, D), lambda i: (i, 0)),
                pl.BlockSpec((tm, H), lambda i: (i, 0)),
            ],
        ),
        compiler_params=pltpu.CompilerParams(
            dimension_semantics=("parallel",),
            vmem_limit_bytes=int(vmem_limit_bytes)),
    )(x2, r2, wd_t, bd, wu_t, bu)

    out = out2.reshape(B, S, H)
    down = down2.reshape(B, S, D)
    up = up2.reshape(B, S, H)
    return out, down, up


def _reference(x, residual_input, w_down, b_down, w_up, b_up, scaling=1.0):
    down = jnp.maximum(x @ w_down.T + b_down, 0.0)
    up = (down @ w_up.T + b_up) * scaling
    return up + residual_input, down, up


if __name__ == "__main__":
    # Small shapes consistent with the module: hidden=32, down_sample=hidden//2=16
    B, S, H = 2, 8, 32
    D = H // 2  # down_sample = input_size // 2 (down_sample=None case)

    key = jax.random.PRNGKey(0)
    k1, k2, k3, k4 = jax.random.split(key, 4)

    x = jax.random.normal(k1, (B, S, H), dtype=jnp.float32)
    residual_input = jax.random.normal(k2, (B, S, H), dtype=jnp.float32)

    # init_bert_weights: Linear weights ~ N(0, 0.02), biases = 0
    w_down = 0.02 * jax.random.normal(k3, (D, H), dtype=jnp.float32)
    b_down = jnp.zeros((D,), dtype=jnp.float32)
    w_up = 0.02 * jax.random.normal(k4, (H, D), dtype=jnp.float32)
    b_up = jnp.zeros((H,), dtype=jnp.float32)

    ref_out, ref_down, ref_up = _reference(x, residual_input,
                                           w_down, b_down, w_up, b_up, 1.0)

    # --- Exact f32 path -----------------------------------------------------
    params_f32 = prepare_adapter_params(w_down, b_down, w_up, b_up, scaling=1.0)
    out, down, up = adapter_forward(x, residual_input, params_f32)
    jax.block_until_ready((out, down, up))

    assert jnp.allclose(out, ref_out, atol=1e-5, rtol=1e-5)
    assert jnp.allclose(down, ref_down, atol=1e-5, rtol=1e-5)
    assert jnp.allclose(up, ref_up, atol=1e-5, rtol=1e-5)

    # --- bf16 MXU fast path (f32 accumulate), activations passed in bf16,
    #     bf16 down/up writebacks — looser tolerance. ------------------------
    params_bf16 = prepare_adapter_params(w_down, b_down, w_up, b_up,
                                         scaling=1.0,
                                         matmul_dtype=jnp.bfloat16)
    out_b, down_b, up_b = adapter_forward(
        x.astype(jnp.bfloat16), residual_input.astype(jnp.bfloat16),
        params_bf16, out_dtype=jnp.float32, save_dtype=jnp.bfloat16)
    jax.block_until_ready((out_b, down_b, up_b))

    assert jnp.allclose(out_b, ref_out, atol=5e-2, rtol=5e-2)
    assert jnp.allclose(down_b.astype(jnp.float32), ref_down, atol=5e-2, rtol=5e-2)
    assert jnp.allclose(up_b.astype(jnp.float32), ref_up, atol=5e-2, rtol=5e-2)

    print("KERNEL_OK")
</pallas_src>

<mosaic_0001>
module attributes {stable_mosaic.version = 11 : i64} {
  func.func @_adapter_kernel(%arg0: i32, %arg1: memref<16x32xf32, #tpu.memory_space<vmem>>, %arg2: memref<16x32xf32, #tpu.memory_space<vmem>>, %arg3: memref<32x16xf32, #tpu.memory_space<vmem>>, %arg4: memref<1x16xf32, #tpu.memory_space<vmem>>, %arg5: memref<16x32xf32, #tpu.memory_space<vmem>>, %arg6: memref<1x32xf32, #tpu.memory_space<vmem>>, %arg7: memref<16x32xf32, #tpu.memory_space<vmem>>, %arg8: memref<16x16xf32, #tpu.memory_space<vmem>>, %arg9: memref<16x32xf32, #tpu.memory_space<vmem>>) attributes {dimension_semantics = [#tpu.dimension_semantics<parallel>], iteration_bounds = array<i64: 1>, scalar_prefetch = 0 : i64, scratch_operands = 0 : i64, tpu.core_type = #tpu.core_type<tc>, window_params = [{transform_indices = @transform_0, window_bounds = array<i64: 16, 32>}, {transform_indices = @transform_1, window_bounds = array<i64: 16, 32>}, {pipeline_mode = #tpu.pipeline_mode<synchronous>, transform_indices = @transform_2, window_bounds = array<i64: 32, 16>}, {pipeline_mode = #tpu.pipeline_mode<synchronous>, transform_indices = @transform_3, window_bounds = array<i64: 1, 16>}, {pipeline_mode = #tpu.pipeline_mode<synchronous>, transform_indices = @transform_4, window_bounds = array<i64: 16, 32>}, {pipeline_mode = #tpu.pipeline_mode<synchronous>, transform_indices = @transform_5, window_bounds = array<i64: 1, 32>}, {transform_indices = @transform_6, window_bounds = array<i64: 16, 32>}, {transform_indices = @transform_7, window_bounds = array<i64: 16, 16>}, {transform_indices = @transform_8, window_bounds = array<i64: 16, 32>}]} {
    %c0 = arith.constant 0 : index
    %c0_0 = arith.constant 0 : index
    %0 = vector.load %arg1[%c0, %c0_0] : memref<16x32xf32, #tpu.memory_space<vmem>>, vector<16x32xf32>
    %c0_1 = arith.constant 0 : index
    %c0_2 = arith.constant 0 : index
    %1 = vector.load %arg3[%c0_1, %c0_2] : memref<32x16xf32, #tpu.memory_space<vmem>>, vector<32x16xf32>
    %cst = arith.constant dense<0.000000e+00> : vector<16x16xf32>
    %2 = tpu.matmul %0, %1, %cst {dimension_numbers = #tpu.dot_dimension_numbers<[1], [0], [0], [1], [0, 0, 1, 1], [], []>} : vector<16x32xf32>, vector<32x16xf32>, vector<16x16xf32> -> vector<16x16xf32>
    %c0_3 = arith.constant 0 : index
    %c0_4 = arith.constant 0 : index
    %3 = vector.load %arg4[%c0_3, %c0_4] : memref<1x16xf32, #tpu.memory_space<vmem>>, vector<1x16xf32>
    %4 = vector.broadcast %3 : vector<1x16xf32> to vector<16x16xf32>
    %5 = arith.addf %2, %4 : vector<16x16xf32>
    %cst_5 = arith.constant 0.000000e+00 : f32
    %6 = vector.broadcast %cst_5 : f32 to vector<16x16xf32>
    %7 = arith.maximumf %5, %6 : vector<16x16xf32>
    %c0_6 = arith.constant 0 : index
    %c0_7 = arith.constant 0 : index
    %8 = vector.load %arg5[%c0_6, %c0_7] : memref<16x32xf32, #tpu.memory_space<vmem>>, vector<16x32xf32>
    %cst_8 = arith.constant dense<0.000000e+00> : vector<16x32xf32>
    %9 = tpu.matmul %7, %8, %cst_8 {dimension_numbers = #tpu.dot_dimension_numbers<[1], [0], [0], [1], [0, 0, 1, 1], [], []>} : vector<16x16xf32>, vector<16x32xf32>, vector<16x32xf32> -> vector<16x32xf32>
    %c0_9 = arith.constant 0 : index
    %c0_10 = arith.constant 0 : index
    %10 = vector.load %arg6[%c0_9, %c0_10] : memref<1x32xf32, #tpu.memory_space<vmem>>, vector<1x32xf32>
    %11 = vector.broadcast %10 : vector<1x32xf32> to vector<16x32xf32>
    %12 = arith.addf %9, %11 : vector<16x32xf32>
    %c0_11 = arith.constant 0 : index
    %c0_12 = arith.constant 0 : index
    %13 = vector.load %arg2[%c0_11, %c0_12] : memref<16x32xf32, #tpu.memory_space<vmem>>, vector<16x32xf32>
    %14 = arith.addf %12, %13 : vector<16x32xf32>
    %c0_13 = arith.constant 0 : index
    %c0_14 = arith.constant 0 : index
    %15 = vector.load %arg8[%c0_13, %c0_14] : memref<16x16xf32, #tpu.memory_space<vmem>>, vector<16x16xf32>
    tpu.vector_store %arg8[%c0_13, %c0_14], %7 {strides = array<i32>} : memref<16x16xf32, #tpu.memory_space<vmem>>, vector<16x16xf32>,
    %c0_15 = arith.constant 0 : index
    %c0_16 = arith.constant 0 : index
    %16 = vector.load %arg9[%c0_15, %c0_16] : memref<16x32xf32, #tpu.memory_space<vmem>>, vector<16x32xf32>
    tpu.vector_store %arg9[%c0_15, %c0_16], %12 {strides = array<i32>} : memref<16x32xf32, #tpu.memory_space<vmem>>, vector<16x32xf32>,
    %c0_17 = arith.constant 0 : index
    %c0_18 = arith.constant 0 : index
    %17 = vector.load %arg7[%c0_17, %c0_18] : memref<16x32xf32, #tpu.memory_space<vmem>>, vector<16x32xf32>
    tpu.vector_store %arg7[%c0_17, %c0_18], %14 {strides = array<i32>} : memref<16x32xf32, #tpu.memory_space<vmem>>, vector<16x32xf32>,
    return
  }
  func.func @transform_0(%arg0: i32) -> (i32, i32) {
    %c0_i32 = arith.constant 0 : i32
    %c0_i32_0 = arith.constant 0 : i32
    return %arg0, %c0_i32 : i32, i32
  }
  func.func @transform_1(%arg0: i32) -> (i32, i32) {
    %c0_i32 = arith.constant 0 : i32
    %c0_i32_0 = arith.constant 0 : i32
    return %arg0, %c0_i32 : i32, i32
  }
  func.func @transform_2(%arg0: i32) -> (i32, i32) {
    %c0_i32 = arith.constant 0 : i32
    %c0_i32_0 = arith.constant 0 : i32
    %c0_i32_1 = arith.constant 0 : i32
    return %c0_i32, %c0_i32_0 : i32, i32
  }
  func.func @transform_3(%arg0: i32) -> (i32, i32) {
    %c0_i32 = arith.constant 0 : i32
    %c0_i32_0 = arith.constant 0 : i32
    %c0_i32_1 = arith.constant 0 : i32
    return %c0_i32, %c0_i32_0 : i32, i32
  }
  func.func @transform_4(%arg0: i32) -> (i32, i32) {
    %c0_i32 = arith.constant 0 : i32
    %c0_i32_0 = arith.constant 0 : i32
    %c0_i32_1 = arith.constant 0 : i32
    return %c0_i32, %c0_i32_0 : i32, i32
  }
  func.func @transform_5(%arg0: i32) -> (i32, i32) {
    %c0_i32 = arith.constant 0 : i32
    %c0_i32_0 = arith.constant 0 : i32
    %c0_i32_1 = arith.constant 0 : i32
    return %c0_i32, %c0_i32_0 : i32, i32
  }
  func.func @transform_6(%arg0: i32) -> (i32, i32) {
    %c0_i32 = arith.constant 0 : i32
    %c0_i32_0 = arith.constant 0 : i32
    return %arg0, %c0_i32 : i32, i32
  }
  func.func @transform_7(%arg0: i32) -> (i32, i32) {
    %c0_i32 = arith.constant 0 : i32
    %c0_i32_0 = arith.constant 0 : i32
    return %arg0, %c0_i32 : i32, i32
  }
  func.func @transform_8(%arg0: i32) -> (i32, i32) {
    %c0_i32 = arith.constant 0 : i32
    %c0_i32_0 = arith.constant 0 : i32
    return %arg0, %c0_i32 : i32, i32
  }
}

</mosaic_0001>

<llo_original>
// kernel: tpu_custom_call.1
$region0: #{tpu_custom_call.1}
  #allocation0 [shape = 'u32[]', space=smem, size = 0x4, offset = 0x4, fixed_abs, tag = 'smem constant byte address 0x4 - core index']
  #allocation1 [shape = 'u32[72,128]{1,0:T(1,128)}', space=vmem, size = 0x9000, scoped, tag = 'internal scratch']
  %s0 = inlined_call_operand.vmem [shape: f32[16,32], index: 0, kind: input, shape index: {}]
  %s1 = inlined_call_operand.vmem [shape: f32[16,32], index: 1, kind: input, shape index: {}]
  %s2 = inlined_call_operand.vmem [shape: f32[32,16], index: 2, kind: input, shape index: {}]
  %s3 = inlined_call_operand.vmem [shape: f32[1,16], index: 3, kind: input, shape index: {}]
  %s4 = inlined_call_operand.vmem [shape: f32[16,32], index: 4, kind: input, shape index: {}]
  %s5 = inlined_call_operand.vmem [shape: f32[1,32], index: 5, kind: input, shape index: {}]
  %s6 = inlined_call_operand.hbm [shape: f32[16,32], index: 6, kind: output, shape index: {0}]
  %s7 = inlined_call_operand.hbm [shape: f32[16,16], index: 7, kind: output, shape index: {1}]
  %s8 = inlined_call_operand.hbm [shape: f32[16,32], index: 8, kind: output, shape index: {2}]
  %9 = xla_tuple %s6, %s7, %s8
  %s10 = sld [smem:[#allocation0]]
  $region50: #{tpu_custom_call.1} parent=0
    _
  %s12 = ssub.s32 1, %s10
  %s13 = scalar_select 0, %s12, %s10
  $region1: #{tpu_custom_call.1} parent=0
    #allocation2 [shape = 'u8[8192]{0}', space=vmem, size = 0x2000, scoped, tag = 'output window, operand 0, single buffered']
    #allocation3 [shape = 's32[1]{0}', space=sflag, size = 0x4, scoped, tag = 'scoped memory for tpu_custom_call.1']
    #allocation4 [shape = 'u8[8192]{0}', space=vmem, size = 0x2000, scoped, tag = 'output window, operand 1, single buffered']
    #allocation5 [shape = 's32[1]{0}', space=sflag, size = 0x4, scoped, tag = 'scoped memory for tpu_custom_call.1']
    #allocation6 [shape = 'u8[8192]{0}', space=vmem, size = 0x2000, scoped, tag = 'output window, operand 2, single buffered']
    %14 = vsyncpa [#allocation3], 0
    %15 = vsyncpa [#allocation5], 0
    // Predicated region
    $region2: #{tpu_custom_call.1} parent=1 // pred_check
      _
    $region3: #{tpu_custom_call.1} parent=1 // pred_check_branch
      %17 = sbr.rel (0) target = $region5
    $region4: #{tpu_custom_call.1} parent=1 // pred_region
      _
    $region5: #{tpu_custom_call.1} parent=1 // pred_fallthru
      _
    // Predicated region
    $region6: #{tpu_custom_call.1} parent=1 // pred_check
      _
    $region7: #{tpu_custom_call.1} parent=1 // pred_check_branch
      %19 = sbr.rel (0) target = $region9
    $region8: #{tpu_custom_call.1} parent=1 // pred_region
      _
    $region9: #{tpu_custom_call.1} parent=1 // pred_fallthru
      _
    // Predicated region
    $region10: #{tpu_custom_call.1} parent=1 // pred_check
      _
    $region11: #{tpu_custom_call.1} parent=1 // pred_check_branch
      %21 = sbr.rel (0) target = $region13
    $region12: #{tpu_custom_call.1} parent=1 // pred_region
      _
    $region13: #{tpu_custom_call.1} parent=1 // pred_fallthru
      _
    // Predicated region
    $region14: #{tpu_custom_call.1} parent=1 // pred_check
      _
    $region15: #{tpu_custom_call.1} parent=1 // pred_check_branch
      %23 = sbr.rel (0) target = $region17
    $region16: #{tpu_custom_call.1} parent=1 // pred_region
      _
    $region17: #{tpu_custom_call.1} parent=1 // pred_fallthru
      _
    // Predicated region
    $region18: #{tpu_custom_call.1} parent=1 // pred_check
      _
    $region19: #{tpu_custom_call.1} parent=1 // pred_check_branch
      %25 = sbr.rel (0) target = $region21
    $region20: #{tpu_custom_call.1} parent=1 // pred_region
      _
    $region21: #{tpu_custom_call.1} parent=1 // pred_fallthru
      _
    // Predicated region
    $region22: #{tpu_custom_call.1} parent=1 // pred_check
      _
    $region23: #{tpu_custom_call.1} parent=1 // pred_check_branch
      %27 = sbr.rel (0) target = $region25
    $region24: #{tpu_custom_call.1} parent=1 // pred_region
      _
    $region25: #{tpu_custom_call.1} parent=1 // pred_fallthru
      _
    %v28 = vld [vmem:[%s0] sm:$0xff]
    %v29 = vld [vmem:[%s0 + $0x8] sm:$0xff]
    %v30 = vld [vmem:[%s2] sm:$0xff]
    %v31 = vld [vmem:[%s2 + $0x8] sm:$0xff]
    %v32 = vld [vmem:[%s2 + $0x10] sm:$0xff]
    %v33 = vld [vmem:[%s2 + $0x18] sm:$0xff]
    %v34 = vld [vmem:[%s3] sm:$0x1]
    %v36 = vperm.slane %v34, 0
    %vm38 = vcmask 261120
    %v40 = vsel %vm38, %v28, 0
    %v43 = vsel %vm38, %v29, 0
    %45 = vmatpush.msra.mxu0 0.0
    %46 = vmatpush.msra.mxu0 0.0
    %47 = vmatpush.msra.mxu0 0.0
    %48 = vmatpush.msra.mxu0 0.0
    %49 = vmatpush.msra.mxu0 0.0
    %50 = vmatpush.msra.mxu0 0.0
    %51 = vmatpush.msra.mxu0 0.0
    %52 = vmatpush.msra.mxu0 0.0
    %53 = vmatpush.msra.mxu0 0.0
    %54 = vmatpush.msra.mxu0 0.0
    %55 = vmatpush.msra.mxu0 0.0
    %56 = vmatpush.msra.mxu0 0.0
    %57 = vmatpush.msra.mxu0 %v33
    %58 = vmatpush.msra.mxu0 %v32
    %59 = vmatpush.msra.mxu0 %v31
    %60 = vmatpush.msra.mxu0 %v30
    %61 = vmatmul.f32.gmra.mxu0 %v40
    %v62 = vpop.f32.mrf.mxu0
    %v63 = vadd.f32 %v36, %v62
    %64 = vmatmul.f32.gmra.mxu0 %v43
    %v65 = vpop.f32.mrf.mxu0
    %v66 = vadd.f32 %v36, %v65
    %67 = vdwg.mxu0
    %v68 = vmax.f32 %v63, 0.0
    %v69 = vmax.f32 %v66, 0.0
    %v70 = vld [vmem:[%s4] sm:$0xff]
    %v71 = vld [vmem:[%s4 + $0x8] sm:$0xff]
    %v72 = vld [vmem:[%s5] sm:$0x1]
    %v74 = vperm.slane %v72, 0
    %vm76 = vcmask 130048
    %v78 = vsel %vm76, %v68, 0
    %v81 = vsel %vm76, %v69, 0
    %83 = vmatpush.msra.mxu0 0.0
    %84 = vmatpush.msra.mxu0 0.0
    %85 = vmatpush.msra.mxu0 0.0
    %86 = vmatpush.msra.mxu0 0.0
    %87 = vmatpush.msra.mxu0 0.0
    %88 = vmatpush.msra.mxu0 0.0
    %89 = vmatpush.msra.mxu0 0.0
    %90 = vmatpush.msra.mxu0 0.0
    %91 = vmatpush.msra.mxu0 0.0
    %92 = vmatpush.msra.mxu0 0.0
    %93 = vmatpush.msra.mxu0 0.0
    %94 = vmatpush.msra.mxu0 0.0
    %95 = vmatpush.msra.mxu0 0.0
    %96 = vmatpush.msra.mxu0 0.0
    %97 = vmatpush.msra.mxu0 %v71
    %98 = vmatpush.msra.mxu0 %v70
    %99 = vmatmul.f32.gmra.mxu0 %v78
    %v100 = vpop.f32.mrf.mxu0
    %v101 = vadd.f32 %v74, %v100
    %102 = vmatmul.f32.gmra.mxu0 %v81
    %v103 = vpop.f32.mrf.mxu0
    %v104 = vadd.f32 %v74, %v103
    %105 = vdwg.mxu0
    %v106 = vld [vmem:[%s1] sm:$0xff]
    %v107 = vld [vmem:[%s1 + $0x8] sm:$0xff]
    %v108 = vadd.f32 %v101, %v106
    %v109 = vadd.f32 %v104, %v107
    %110 = vst.msk [vmem:[#allocation4] sm:$0xff] %vm76, %v68
    %111 = vst.msk [vmem:[#allocation4 + $0x8] sm:$0xff] %vm76, %v69
    %112 = vst.msk [vmem:[#allocation6] sm:$0xff] %vm38, %v101
    %113 = vst.msk [vmem:[#allocation6 + $0x8] sm:$0xff] %vm38, %v104
    %114 = vst.msk [vmem:[#allocation2] sm:$0xff] %vm38, %v108
    %115 = vst.msk [vmem:[#allocation2 + $0x8] sm:$0xff] %vm38, %v109
    // Predicated region
    $region26: #{tpu_custom_call.1} parent=1 // pred_check
      _
    $region27: #{tpu_custom_call.1} parent=1 // pred_check_branch
      %117 = sbr.rel (0) target = $region29
    $region28: #{tpu_custom_call.1} parent=1 // pred_region
      %119 = vsyncadd [#allocation3], 0
      %s120 = sshll.u32 [#allocation2], 4
      %s121 = int_to_ptr.vmem [resolvable:$true] %s120
      %s122 = sshll.u32 %s6, 4
      %s123 = int_to_ptr.hbm [resolvable:$true] %s122
      %128 = dma.vmem_to_hbm [thread:$0]  %s121, 256, %s123, [#allocation3], 128, 128, 8
    $region29: #{tpu_custom_call.1} parent=1 // pred_fallthru
      _
    // Predicated region
    $region30: #{tpu_custom_call.1} parent=1 // pred_check
      _
    $region31: #{tpu_custom_call.1} parent=1 // pred_check_branch
      %130 = sbr.rel (0) target = $region33
    $region32: #{tpu_custom_call.1} parent=1 // pred_region
      %132 = vsyncadd [#allocation5], 0
      %s133 = sshll.u32 [#allocation4], 4
      %s134 = int_to_ptr.vmem [resolvable:$true] %s133
      %s135 = sshll.u32 %s7, 4
      %s136 = int_to_ptr.hbm [resolvable:$true] %s135
      %141 = dma.vmem_to_hbm [thread:$0]  %s134, 256, %s136, [#allocation5], 128, 128, 8
    $region33: #{tpu_custom_call.1} parent=1 // pred_fallthru
      _
    // Predicated region
    $region34: #{tpu_custom_call.1} parent=1 // pred_check
      _
    $region35: #{tpu_custom_call.1} parent=1 // pred_check_branch
      %143 = sbr.rel (0) target = $region37
    $region36: #{tpu_custom_call.1} parent=1 // pred_region
      %145 = vsyncadd [#allocation5], 0
      %s146 = sshll.u32 [#allocation6], 4
      %s147 = int_to_ptr.vmem [resolvable:$true] %s146
      %s148 = sshll.u32 %s8, 4
      %s149 = int_to_ptr.hbm [resolvable:$true] %s148
      %154 = dma.vmem_to_hbm [thread:$0]  %s147, 256, %s149, [#allocation5], 128, 128, 8
    $region37: #{tpu_custom_call.1} parent=1 // pred_fallthru
      _
    // Predicated region
    $region38: #{tpu_custom_call.1} parent=1 // pred_check
      _
    $region39: #{tpu_custom_call.1} parent=1 // pred_check_branch
      %156 = sbr.rel (0) target = $region41
    $region40: #{tpu_custom_call.1} parent=1 // pred_region
      %158 = dma.done [#allocation3], 256
    $region41: #{tpu_custom_call.1} parent=1 // pred_fallthru
      _
    // Predicated region
    $region42: #{tpu_custom_call.1} parent=1 // pred_check
      _
    $region43: #{tpu_custom_call.1} parent=1 // pred_check_branch
      %160 = sbr.rel (0) target = $region45
    $region44: #{tpu_custom_call.1} parent=1 // pred_region
      %162 = dma.done [#allocation5], 256
    $region45: #{tpu_custom_call.1} parent=1 // pred_fallthru
      _
    // Predicated region
    $region46: #{tpu_custom_call.1} parent=1 // pred_check
      _
    $region47: #{tpu_custom_call.1} parent=1 // pred_check_branch
      %164 = sbr.rel (0) target = $region49
    $region48: #{tpu_custom_call.1} parent=1 // pred_region
      %166 = dma.done [#allocation5], 256
    $region49: #{tpu_custom_call.1} parent=1 // pred_fallthru
      _
    %167 = vsyncpa [#allocation3], 1
    %168 = vsyncpa [#allocation5], 1

</llo_original>
